<compile_context>
chip_gen: v7x
topology: tpu7x:2x2x1
jax: 0.10.0
libtpu: 0.0.40
codegen_flags: <defaults>
</compile_context>

<pallas_src>
import functools
import math

import jax
import jax.numpy as jnp
from jax.experimental import pallas as pl
from jax.experimental.pallas import tpu as pltpu


# ----------------------------------------------------------------------------- config
_TILE_M = 256   # TODO(synk): cap at 128 on v5e (4x128x128 MXU saturates at 128 rows).
_TILE_N = 256
_TILE_K = 512
_VMEM_LIMIT = 48 * 1024 * 1024   # below v7x's 64 MiB physical VMEM, above 32 MiB default


def _compiler_params(**kw):
    # jax >= 0.5 uses pltpu.CompilerParams; older releases used TPUCompilerParams.
    cls = getattr(pltpu, "CompilerParams", None)
    if cls is None:
        cls = getattr(pltpu, "TPUCompilerParams")
    return cls(**kw)


def _reciprocal(x):
    recip = getattr(pl, "reciprocal", None)
    if recip is not None:
        return recip(x, approx=True)
    return 1.0 / x


def _ceil_to(x, m):
    return pl.cdiv(x, m) * m


def _pad2(a, rows, cols):
    r, c = a.shape
    if r == rows and c == cols:
        return a
    return jnp.pad(a, ((0, rows - r), (0, cols - c)))


# ----------------------------------------------------------------------------- helpers
def _gelu_tanh(x):
    # gelu_fn is stolen from the external model; tanh-approx GELU is used here.
    # TODO(synk): if the original gelu_fn is erf-based nn.GELU(), swap in lax.erf.
    return 0.5 * x * (1.0 + jnp.tanh(0.7978845608028654 * (x + 0.044715 * x * x * x)))


def _apply_act(y, activation):
    if activation == "gelu":
        return _gelu_tanh(y)
    if activation == "relu":
        return jnp.maximum(y, 0.0)
    return y


# ----------------------------------------------------------------------------- kernels
def matmul_kernel(x_ref, w_ref, b_ref, o_ref, acc_ref, *, activation):
    # K-tiled accumulation: init at k==0, bias+activation+store at k==last.
    @pl.when(pl.program_id(2) == 0)
    def _():
        acc_ref[...] = jnp.zeros_like(acc_ref)

    acc_ref[...] += jnp.dot(x_ref[...], w_ref[...],
                            preferred_element_type=jnp.float32)
    # TODO(synk): optionally cast x/w tiles to bfloat16 before the dot for full
    # MXU rate on v6e/v7x (keep the accumulator in f32).

    @pl.when(pl.program_id(2) == pl.num_programs(2) - 1)
    def _():
        y = acc_ref[...] + b_ref[...]
        o_ref[...] = _apply_act(y, activation).astype(o_ref.dtype)


def add_layernorm_kernel(a_ref, b_ref, g_ref, beta_ref, o_ref, *, eps, activation):
    # Fused residual add + layernorm (+ optional gelu/relu), all in f32.
    x = a_ref[...] + b_ref[...]
    mu = jnp.mean(x, axis=-1, keepdims=True)
    var = jnp.mean((x - mu) ** 2, axis=-1, keepdims=True)
    y = (x - mu) * jax.lax.rsqrt(var + eps) * g_ref[...] + beta_ref[...]
    o_ref[...] = _apply_act(y, activation)


def attention_kernel(q_ref, k_ref, v_ref, o_ref, *, scale, causal):
    # All heads of one batch element resident in the block.
    q = q_ref[0]          # (H, Sq, Dh)
    k = k_ref[0]          # (H, Sk, Dh)
    v = v_ref[0]          # (H, Sk, Dh)
    # batched contraction on the last dims -> no explicit k.T (keeps XLU free)
    s = jnp.einsum("hqd,hkd->hqk", q, k,
                   preferred_element_type=jnp.float32) * scale
    if causal:
        sq, sk = s.shape[1], s.shape[2]
        row = jax.lax.broadcasted_iota(jnp.int32, (sq, sk), 0)
        col = jax.lax.broadcasted_iota(jnp.int32, (sq, sk), 1)
        s = jnp.where((col <= row)[None, :, :], s, -1e30)  # generate_square_subsequent_mask
    m = jnp.max(s, axis=-1, keepdims=True)
    p = jnp.exp(s - m)
    denom = jnp.sum(p, axis=-1, keepdims=True)
    p = p * _reciprocal(denom)           # EUP reciprocal instead of a VPU divide
    o_ref[0] = jnp.einsum("hqk,hkd->hqd", p, v,
                          preferred_element_type=jnp.float32)


# ----------------------------------------------------------------------------- wrappers
def linear(x, w, b, activation="none"):
    """y = act(x @ w + b) with M/N/K tiling, padding, and f32 accumulation."""
    m, k = x.shape
    n = w.shape[1]
    tm = min(_TILE_M, _ceil_to(m, 8))
    tn = min(_TILE_N, _ceil_to(n, 128))
    tk = min(_TILE_K, _ceil_to(k, 128))
    mp, kp, np_ = _ceil_to(m, tm), _ceil_to(k, tk), _ceil_to(n, tn)

    xp = _pad2(x, mp, kp)
    wp = _pad2(w, kp, np_)
    bp = _pad2(b.reshape(1, n), 1, np_)

    out = pl.pallas_call(
        functools.partial(matmul_kernel, activation=activation),
        out_shape=jax.ShapeDtypeStruct((mp, np_), jnp.float32),
        grid=(mp // tm, np_ // tn, kp // tk),
        in_specs=[
            pl.BlockSpec((tm, tk), lambda i, j, kk: (i, kk)),
            pl.BlockSpec((tk, tn), lambda i, j, kk: (kk, j)),
            pl.BlockSpec((1, tn), lambda i, j, kk: (0, j)),
        ],
        out_specs=pl.BlockSpec((tm, tn), lambda i, j, kk: (i, j)),
        scratch_shapes=[pltpu.VMEM((tm, tn), jnp.float32)],
        compiler_params=_compiler_params(
            dimension_semantics=("parallel", "parallel", "arbitrary"),
            vmem_limit_bytes=_VMEM_LIMIT),
    )(xp, wp, bp)
    if mp != m or np_ != n:
        out = out[:m, :n]
    return out


def add_layernorm(a, b, gamma, beta, eps=1e-5, activation="none"):
    """act(layernorm(a + b)); feature dim kept whole (no padding -> exact stats)."""
    m, d = a.shape
    tm = min(_TILE_M, _ceil_to(m, 8))
    mp = _ceil_to(m, tm)
    if mp != m:
        a = jnp.pad(a, ((0, mp - m), (0, 0)))
        b = jnp.pad(b, ((0, mp - m), (0, 0)))
    out = pl.pallas_call(
        functools.partial(add_layernorm_kernel, eps=eps, activation=activation),
        out_shape=jax.ShapeDtypeStruct((mp, d), jnp.float32),
        grid=(mp // tm,),
        in_specs=[
            pl.BlockSpec((tm, d), lambda i: (i, 0)),
            pl.BlockSpec((tm, d), lambda i: (i, 0)),
            pl.BlockSpec((1, d), lambda i: (0, 0)),
            pl.BlockSpec((1, d), lambda i: (0, 0)),
        ],
        out_specs=pl.BlockSpec((tm, d), lambda i: (i, 0)),
        compiler_params=_compiler_params(
            dimension_semantics=("parallel",),
            vmem_limit_bytes=_VMEM_LIMIT),
    )(a, b, gamma.reshape(1, d), beta.reshape(1, d))
    return out[:m] if mp != m else out


def attention(q, k, v, causal):
    """q,k,v: (B, H, S, Dh) -> (B, H, Sq, Dh); grid over batch, heads in-block."""
    b, h, sq, dh = q.shape
    sk = k.shape[2]
    scale = 1.0 / math.sqrt(dh)
    return pl.pallas_call(
        functools.partial(attention_kernel, scale=scale, causal=causal),
        out_shape=jax.ShapeDtypeStruct((b, h, sq, dh), jnp.float32),
        grid=(b,),
        in_specs=[
            pl.BlockSpec((1, h, sq, dh), lambda i: (i, 0, 0, 0)),
            pl.BlockSpec((1, h, sk, dh), lambda i: (i, 0, 0, 0)),
            pl.BlockSpec((1, h, sk, dh), lambda i: (i, 0, 0, 0)),
        ],
        out_specs=pl.BlockSpec((1, h, sq, dh), lambda i: (i, 0, 0, 0)),
        compiler_params=_compiler_params(
            dimension_semantics=("parallel",),
            vmem_limit_bytes=_VMEM_LIMIT),
    )(q, k, v)


# ----------------------------------------------------------------------------- model glue
def self_attention(x, p, prefix, nheads):
    # PyTorch nn.MultiheadAttention (seq-first, eval / dropout=0), fused QKV matmul.
    s, b, d = x.shape
    dh = d // nheads
    qkv = linear(x.reshape(s * b, d), p[f"{prefix}_wqkv"], p[f"{prefix}_bqkv"])  # (S*B, 3D)
    # TODO(synk): the head split/merge transposes below are wrapper-level XLA ops;
    # they could be folded into BlockSpec index_maps with a strided-row layout.
    qkv = qkv.reshape(s, b, 3, nheads, dh).transpose(2, 1, 3, 0, 4)  # (3, B, H, S, Dh)
    o = attention(qkv[0], qkv[1], qkv[2], causal=True)               # (B, H, S, Dh)
    o = o.transpose(2, 0, 1, 3).reshape(s * b, d)
    o = linear(o, p[f"{prefix}_wo"], p[f"{prefix}_bo"])
    return o.reshape(s, b, d)


def cross_attention(x, memory, p, prefix, nheads):
    sq, b, d = x.shape
    sk = memory.shape[0]
    dh = d // nheads
    q = linear(x.reshape(sq * b, d), p[f"{prefix}_wq"], p[f"{prefix}_bq"])
    kv = linear(memory.reshape(sk * b, d), p[f"{prefix}_wkv"], p[f"{prefix}_bkv"])  # (Sk*B, 2D)
    q = q.reshape(sq, b, nheads, dh).transpose(1, 2, 0, 3)            # (B, H, Sq, Dh)
    kv = kv.reshape(sk, b, 2, nheads, dh).transpose(2, 1, 3, 0, 4)    # (2, B, H, Sk, Dh)
    o = attention(q, kv[0], kv[1], causal=False)                      # (B, H, Sq, Dh)
    o = o.transpose(2, 0, 1, 3).reshape(sq * b, d)
    o = linear(o, p[f"{prefix}_wo"], p[f"{prefix}_bo"])
    return o.reshape(sq, b, d)


def decoder_layer(tgt, memory, p, nheads):
    # PyTorch nn.TransformerDecoderLayer, post-norm, relu FFN, eval (dropout = id).
    s, b, d = tgt.shape
    x = tgt
    sa = self_attention(x, p, "sa", nheads)
    x = add_layernorm(x.reshape(s * b, d), sa.reshape(s * b, d),
                      p["ln1_g"], p["ln1_b"]).reshape(s, b, d)
    ca = cross_attention(x, memory, p, "ca", nheads)
    x = add_layernorm(x.reshape(s * b, d), ca.reshape(s * b, d),
                      p["ln2_g"], p["ln2_b"]).reshape(s, b, d)
    h = linear(x.reshape(s * b, d), p["ff_w1"], p["ff_b1"], activation="relu")
    ff = linear(h, p["ff_w2"], p["ff_b2"])
    # final layernorm with the decoder-output gelu_fn fused in
    x = add_layernorm(x.reshape(s * b, d), ff, p["ln3_g"], p["ln3_b"],
                      activation="gelu").reshape(s, b, d)
    return x


def fold_corruption_mask(p):
    """Prep-time fold: Linear(x * keep) == x @ (W * keep[:, None]) + b."""
    keep = 1.0 - p["corruption_mask"]
    p = dict(p)
    p["mem_w_fx"] = p["mem_w"] * keep[:, None]
    p["proj_w_fx"] = p["proj_w"] * keep[:, None]
    return p


def datafix_transfer_forward(x, p, nheads):
    """x: (S, B, D_in) float32.  Returns dict like forward_encoded_output."""
    s, b, d_in = x.shape
    d = p["enc_w"].shape[1]
    # TODO(synk): the real `encoder` is an external vision model; stood in by a Linear.
    feat = linear(x.reshape(s * b, d_in), p["enc_w"], p["enc_b"])          # (S*B, D)
    # memory = self.memory(masked features)   [mask pre-folded into weights]
    memory = linear(feat, p["mem_w_fx"], p["mem_b"]).reshape(s, b, d)
    # projected = gelu(self.projection(masked features))
    projected = linear(feat, p["proj_w_fx"], p["proj_b"],
                       activation="gelu").reshape(s, b, d)
    # decoded = gelu(self.decoder(tgt=projected, memory=memory, tgt_mask=causal))
    decoded = decoder_layer(projected, memory, p, nheads)
    # output = self.lm_head(decoded)
    vocab = p["lm_w"].shape[1]
    output = linear(decoded.reshape(s * b, d), p["lm_w"], p["lm_b"]).reshape(s, b, vocab)
    return {"features": decoded, "language_head_output": output, "hidden_states": None}


# ----------------------------------------------------------------------------- params
def init_params(key, d_in, d_model, d_ff, vocab):
    ks = jax.random.split(key, 16)
    it = iter(range(16))

    def w(shape, scale=0.05):
        return (scale * jax.random.normal(ks[next(it)], shape)).astype(jnp.float32)

    z = lambda n: jnp.zeros((n,), jnp.float32)
    one = lambda n: jnp.ones((n,), jnp.float32)
    p = {
        "enc_w": w((d_in, d_model)), "enc_b": z(d_model),
        "mem_w": w((d_model, d_model)), "mem_b": z(d_model),
        "proj_w": w((d_model, d_model)), "proj_b": z(d_model),
        # decoder layer: self-attn (fused QKV)
        "sa_wqkv": w((d_model, 3 * d_model)), "sa_bqkv": z(3 * d_model),
        "sa_wo": w((d_model, d_model)), "sa_bo": z(d_model),
        # decoder layer: cross-attn (Q separate, fused KV on memory)
        "ca_wq": w((d_model, d_model)), "ca_bq": z(d_model),
        "ca_wkv": w((d_model, 2 * d_model)), "ca_bkv": z(2 * d_model),
        "ca_wo": w((d_model, d_model)), "ca_bo": z(d_model),
        # decoder layer: FFN + norms
        "ff_w1": w((d_model, d_ff)), "ff_b1": z(d_ff),
        "ff_w2": w((d_ff, d_model)), "ff_b2": z(d_model),
        "ln1_g": one(d_model), "ln1_b": z(d_model),
        "ln2_g": one(d_model), "ln2_b": z(d_model),
        "ln3_g": one(d_model), "ln3_b": z(d_model),
        # lm head
        "lm_w": w((d_model, vocab)), "lm_b": z(vocab),
        # DataFix corruption mask (1 = corrupted feature, dropped out).
        # TODO(synk): DFLocate.shift_location is offline data analysis; mask is synthesized.
        "corruption_mask": (jax.random.uniform(ks[next(it)], (d_model,)) < 0.25
                            ).astype(jnp.float32),
    }
    return p


# ----------------------------------------------------------------------------- main
if __name__ == "__main__":
    S, B, D_IN = 8, 2, 16
    D_MODEL, N_HEADS, D_FF, VOCAB = 32, 4, 64, 50

    key = jax.random.PRNGKey(0)
    kx, kp = jax.random.split(key)
    x = jax.random.normal(kx, (S, B, D_IN), dtype=jnp.float32)
    params = fold_corruption_mask(init_params(kp, D_IN, D_MODEL, D_FF, VOCAB))

    out = datafix_transfer_forward(x, params, N_HEADS)
    jax.block_until_ready(out["features"])
    jax.block_until_ready(out["language_head_output"])

    assert out["features"].shape == (S, B, D_MODEL)
    assert out["language_head_output"].shape == (S, B, VOCAB)
    assert bool(jnp.all(jnp.isfinite(out["features"])))
    assert bool(jnp.all(jnp.isfinite(out["language_head_output"])))
    print("KERNEL_OK")
</pallas_src>

<mosaic_0001>
module attributes {stable_mosaic.version = 11 : i64} {
  func.func @matmul_kernel(%arg0: i32, %arg1: i32, %arg2: i32, %arg3: memref<16x128xf32, #tpu.memory_space<vmem>>, %arg4: memref<128x128xf32, #tpu.memory_space<vmem>>, %arg5: memref<1x128xf32, #tpu.memory_space<vmem>>, %arg6: memref<16x128xf32, #tpu.memory_space<vmem>>, %arg7: memref<16x128xf32, #tpu.memory_space<vmem>>) attributes {dimension_semantics = [#tpu.dimension_semantics<parallel>, #tpu.dimension_semantics<parallel>, #tpu.dimension_semantics<arbitrary>], iteration_bounds = array<i64: 1, 1, 1>, scalar_prefetch = 0 : i64, scratch_operands = 1 : i64, tpu.core_type = #tpu.core_type<tc>, window_params = [{transform_indices = @transform_0, window_bounds = array<i64: 16, 128>}, {transform_indices = @transform_1, window_bounds = array<i64: 128, 128>}, {transform_indices = @transform_2, window_bounds = array<i64: 1, 128>}, {transform_indices = @transform_3, window_bounds = array<i64: 16, 128>}]} {
    %c0_i32 = arith.constant 0 : i32
    %0 = arith.cmpi eq, %arg2, %c0_i32 : i32
    %1 = arith.extui %0 : i1 to i32
    %c0_i32_0 = arith.constant 0 : i32
    %2 = arith.cmpi ne, %1, %c0_i32_0 : i32
    scf.if %2 {
      %cst_10 = arith.constant 0.000000e+00 : f32
      %12 = vector.broadcast %cst_10 : f32 to vector<16x128xf32>
      %c0_11 = arith.constant 0 : index
      %c0_12 = arith.constant 0 : index
      %13 = vector.load %arg7[%c0_11, %c0_12] : memref<16x128xf32, #tpu.memory_space<vmem>>, vector<16x128xf32>
      tpu.vector_store %arg7[%c0_11, %c0_12], %12 {strides = array<i32>} : memref<16x128xf32, #tpu.memory_space<vmem>>, vector<16x128xf32>,
    } else {
    }
    %c0 = arith.constant 0 : index
    %c0_1 = arith.constant 0 : index
    %3 = vector.load %arg7[%c0, %c0_1] : memref<16x128xf32, #tpu.memory_space<vmem>>, vector<16x128xf32>
    %c0_2 = arith.constant 0 : index
    %c0_3 = arith.constant 0 : index
    %4 = vector.load %arg3[%c0_2, %c0_3] : memref<16x128xf32, #tpu.memory_space<vmem>>, vector<16x128xf32>
    %c0_4 = arith.constant 0 : index
    %c0_5 = arith.constant 0 : index
    %5 = vector.load %arg4[%c0_4, %c0_5] : memref<128x128xf32, #tpu.memory_space<vmem>>, vector<128x128xf32>
    %cst = arith.constant dense<0.000000e+00> : vector<16x128xf32>
    %6 = tpu.matmul %4, %5, %cst {dimension_numbers = #tpu.dot_dimension_numbers<[1], [0], [0], [1], [0, 0, 1, 1], [], []>} : vector<16x128xf32>, vector<128x128xf32>, vector<16x128xf32> -> vector<16x128xf32>
    %7 = arith.addf %3, %6 : vector<16x128xf32>
    %c0_6 = arith.constant 0 : index
    %c0_7 = arith.constant 0 : index
    %8 = vector.load %arg7[%c0_6, %c0_7] : memref<16x128xf32, #tpu.memory_space<vmem>>, vector<16x128xf32>
    tpu.vector_store %arg7[%c0_6, %c0_7], %7 {strides = array<i32>} : memref<16x128xf32, #tpu.memory_space<vmem>>, vector<16x128xf32>,
    %c0_i32_8 = arith.constant 0 : i32
    %9 = arith.cmpi eq, %arg2, %c0_i32_8 : i32
    %10 = arith.extui %9 : i1 to i32
    %c0_i32_9 = arith.constant 0 : i32
    %11 = arith.cmpi ne, %10, %c0_i32_9 : i32
    scf.if %11 {
      %c0_10 = arith.constant 0 : index
      %c0_11 = arith.constant 0 : index
      %12 = vector.load %arg7[%c0_10, %c0_11] : memref<16x128xf32, #tpu.memory_space<vmem>>, vector<16x128xf32>
      %c0_12 = arith.constant 0 : index
      %c0_13 = arith.constant 0 : index
      %13 = vector.load %arg5[%c0_12, %c0_13] : memref<1x128xf32, #tpu.memory_space<vmem>>, vector<1x128xf32>
      %14 = vector.broadcast %13 : vector<1x128xf32> to vector<16x128xf32>
      %15 = arith.addf %12, %14 : vector<16x128xf32>
      %c0_14 = arith.constant 0 : index
      %c0_15 = arith.constant 0 : index
      %16 = vector.load %arg6[%c0_14, %c0_15] : memref<16x128xf32, #tpu.memory_space<vmem>>, vector<16x128xf32>
      tpu.vector_store %arg6[%c0_14, %c0_15], %15 {strides = array<i32>} : memref<16x128xf32, #tpu.memory_space<vmem>>, vector<16x128xf32>,
    } else {
    }
    return
  }
  func.func @transform_0(%arg0: i32, %arg1: i32, %arg2: i32) -> (i32, i32) {
    %c0_i32 = arith.constant 0 : i32
    return %arg0, %arg2 : i32, i32
  }
  func.func @transform_1(%arg0: i32, %arg1: i32, %arg2: i32) -> (i32, i32) {
    %c0_i32 = arith.constant 0 : i32
    return %arg2, %arg1 : i32, i32
  }
  func.func @transform_2(%arg0: i32, %arg1: i32, %arg2: i32) -> (i32, i32) {
    %c0_i32 = arith.constant 0 : i32
    %c0_i32_0 = arith.constant 0 : i32
    return %c0_i32, %arg1 : i32, i32
  }
  func.func @transform_3(%arg0: i32, %arg1: i32, %arg2: i32) -> (i32, i32) {
    %c0_i32 = arith.constant 0 : i32
    return %arg0, %arg1 : i32, i32
  }
}

</mosaic_0001>

<llo_original>
// kernel: tpu_custom_call.1
$region0: #{tpu_custom_call.1}
  #allocation0 [shape = 'u32[]', space=smem, size = 0x4, offset = 0x4, fixed_abs, tag = 'smem constant byte address 0x4 - core index']
  #allocation1 [shape = 'u32[144,128]{1,0:T(1,128)}', space=vmem, size = 0x12000, scoped, tag = 'internal scratch']
  #allocation2 [shape = 'f32[16,128]{1,0:T(8,128)}', space=vmem, size = 0x2000, scoped, tag = 'scratch operand']
  %s0 = inlined_call_operand.hbm [shape: f32[16,128], index: 0, kind: input, shape index: {}]
  %s1 = inlined_call_operand.hbm [shape: f32[128,128], index: 1, kind: input, shape index: {}]
  %s2 = inlined_call_operand.vmem [shape: f32[1,128], index: 2, kind: input, shape index: {}]
  %s3 = inlined_call_operand.hbm [shape: f32[16,128], index: 3, kind: output, shape index: {}]
  %s4 = sld [smem:[#allocation0]]
  $region38: #{tpu_custom_call.1} parent=0
    _
  %s6 = ssub.s32 1, %s4
  %s7 = scalar_select 0, %s6, %s4
  $region1: #{tpu_custom_call.1} parent=0
    #allocation3 [shape = 'u8[8192]{0}', space=vmem, size = 0x2000, scoped, tag = 'input window, operand 0, single buffered']
    #allocation4 [shape = 's32[1]{0}', space=sflag, size = 0x4, scoped, tag = 'scoped memory for tpu_custom_call.1']
    #allocation5 [shape = 's32[1]{0}', space=sflag, size = 0x4, scoped, tag = 'scoped memory for tpu_custom_call.1']
    #allocation6 [shape = 'u8[65536]{0}', space=vmem, size = 0x10000, scoped, tag = 'input window, operand 1, single buffered']
    #allocation7 [shape = 's32[1]{0}', space=sflag, size = 0x4, scoped, tag = 'scoped memory for tpu_custom_call.1']
    #allocation8 [shape = 'u8[8192]{0}', space=vmem, size = 0x2000, scoped, tag = 'output window, operand 0, single buffered']
    %8 = vsyncpa [#allocation4], 0
    %9 = vsyncpa [#allocation7], 0
    %10 = vsyncpa [#allocation5], 0
    // Predicated region
    $region2: #{tpu_custom_call.1} parent=1 // pred_check
      _
    $region3: #{tpu_custom_call.1} parent=1 // pred_check_branch
      %12 = sbr.rel (0) target = $region5
    $region4: #{tpu_custom_call.1} parent=1 // pred_region
      %s14 = ssub.s32 256, 256
      %15 = vsyncadd [#allocation4], %s14
      %s16 = sshll.u32 [#allocation3], 4
      %s17 = int_to_ptr.vmem [resolvable:$true] %s16
      %22 = dma.hbm_to_vmem [thread:$0]  %s0, 256, %s17, [#allocation4], 128, 128, 8
    $region5: #{tpu_custom_call.1} parent=1 // pred_fallthru
      _
    // Predicated region
    $region6: #{tpu_custom_call.1} parent=1 // pred_check
      _
    $region7: #{tpu_custom_call.1} parent=1 // pred_check_branch
      %24 = sbr.rel (0) target = $region9
    $region8: #{tpu_custom_call.1} parent=1 // pred_region
      %s26 = ssub.s32 2048, 2048
      %27 = vsyncadd [#allocation7], %s26
      %s28 = sshll.u32 [#allocation6], 4
      %s29 = int_to_ptr.vmem [resolvable:$true] %s28
      %34 = dma.hbm_to_vmem [thread:$0]  %s1, 2048, %s29, [#allocation7], 128, 128, 8
    $region9: #{tpu_custom_call.1} parent=1 // pred_fallthru
      _
    // Predicated region
    $region10: #{tpu_custom_call.1} parent=1 // pred_check
      _
    $region11: #{tpu_custom_call.1} parent=1 // pred_check_branch
      %36 = sbr.rel (0) target = $region13
    $region12: #{tpu_custom_call.1} parent=1 // pred_region
      _
    $region13: #{tpu_custom_call.1} parent=1 // pred_fallthru
      _
    // Predicated region
    $region14: #{tpu_custom_call.1} parent=1 // pred_check
      _
    $region15: #{tpu_custom_call.1} parent=1 // pred_check_branch
      %38 = sbr.rel (0) target = $region17
    $region16: #{tpu_custom_call.1} parent=1 // pred_region
      %39 = dma.done [#allocation4], 256
    $region17: #{tpu_custom_call.1} parent=1 // pred_fallthru
      _
    // Predicated region
    $region18: #{tpu_custom_call.1} parent=1 // pred_check
      _
    $region19: #{tpu_custom_call.1} parent=1 // pred_check_branch
      %41 = sbr.rel (0) target = $region21
    $region20: #{tpu_custom_call.1} parent=1 // pred_region
      %42 = dma.done [#allocation7], 2048
    $region21: #{tpu_custom_call.1} parent=1 // pred_fallthru
      _
    %p43 = scmp.eq.s32.totalorder 0, 0
    // Predicated region
    $region22: #{tpu_custom_call.1} parent=1 // pred_check
      %p44 = pneg %p43
    $region23: #{tpu_custom_call.1} parent=1 // pred_check_branch
      %46 = sbr.rel (%p44) target = $region25
    $region24: #{tpu_custom_call.1} parent=1 // pred_region
      %47 = vst [vmem:[#allocation2] sm:$0xff] 0.0
      %48 = vst [vmem:[#allocation2 + $0x8] sm:$0xff] 0.0
    $region25: #{tpu_custom_call.1} parent=1 // pred_fallthru
      _
    %v49 = vld [vmem:[#allocation2] sm:$0xff]
    %v50 = vld [vmem:[#allocation2 + $0x8] sm:$0xff]
    %v51 = vld [vmem:[#allocation3] sm:$0xff]
    %v52 = vld [vmem:[#allocation3 + $0x8] sm:$0xff]
    %v53 = vld [vmem:[#allocation6] sm:$0xff]
    %v54 = vld [vmem:[#allocation6 + $0x8] sm:$0xff]
    %v55 = vld [vmem:[#allocation6 + $0x10] sm:$0xff]
    %v56 = vld [vmem:[#allocation6 + $0x18] sm:$0xff]
    %v57 = vld [vmem:[#allocation6 + $0x20] sm:$0xff]
    %v58 = vld [vmem:[#allocation6 + $0x28] sm:$0xff]
    %v59 = vld [vmem:[#allocation6 + $0x30] sm:$0xff]
    %v60 = vld [vmem:[#allocation6 + $0x38] sm:$0xff]
    %v61 = vld [vmem:[#allocation6 + $0x40] sm:$0xff]
    %v62 = vld [vmem:[#allocation6 + $0x48] sm:$0xff]
    %v63 = vld [vmem:[#allocation6 + $0x50] sm:$0xff]
    %v64 = vld [vmem:[#allocation6 + $0x58] sm:$0xff]
    %v65 = vld [vmem:[#allocation6 + $0x60] sm:$0xff]
    %v66 = vld [vmem:[#allocation6 + $0x68] sm:$0xff]
    %v67 = vld [vmem:[#allocation6 + $0x70] sm:$0xff]
    %v68 = vld [vmem:[#allocation6 + $0x78] sm:$0xff]
    %69 = vmatprep.subr.mxu0 0.0
    %70 = vmatpush1.msra.mxu0 %v53
    %71 = vmatprep.subr.mxu0 0.0
    %72 = vmatpush1.msra.mxu0 %v54
    %73 = vmatprep.subr.mxu0 0.0
    %74 = vmatpush1.msra.mxu0 %v55
    %75 = vmatprep.subr.mxu0 0.0
    %76 = vmatpush1.msra.mxu0 %v56
    %77 = vmatprep.subr.mxu0 0.0
    %78 = vmatpush1.msra.mxu0 %v57
    %79 = vmatprep.subr.mxu0 0.0
    %80 = vmatpush1.msra.mxu0 %v58
    %81 = vmatprep.subr.mxu0 0.0
    %82 = vmatpush1.msra.mxu0 %v59
    %83 = vmatprep.subr.mxu0 0.0
    %84 = vmatpush1.msra.mxu0 %v60
    %85 = vmatprep.subr.mxu0 0.0
    %86 = vmatpush1.msra.mxu0 %v61
    %87 = vmatprep.subr.mxu0 0.0
    %88 = vmatpush1.msra.mxu0 %v62
    %89 = vmatprep.subr.mxu0 0.0
    %90 = vmatpush1.msra.mxu0 %v63
    %91 = vmatprep.subr.mxu0 0.0
    %92 = vmatpush1.msra.mxu0 %v64
    %93 = vmatprep.subr.mxu0 0.0
    %94 = vmatpush1.msra.mxu0 %v65
    %95 = vmatprep.subr.mxu0 0.0
    %96 = vmatpush1.msra.mxu0 %v66
    %97 = vmatprep.subr.mxu0 0.0
    %98 = vmatpush1.msra.mxu0 %v67
    %99 = vmatprep.subr.mxu0 0.0
    %100 = vmatpush1.msra.mxu0 %v68
    %101 = vmatprep.subr.mxu0 0.0
    %102 = vmatpush1.msra.mxu0 0.0
    %103 = vmatprep.subr.mxu0 0.0
    %104 = vmatpush1.msra.mxu0 0.0
    %105 = vmatprep.subr.mxu0 0.0
    %106 = vmatpush1.msra.mxu0 0.0
    %107 = vmatprep.subr.mxu0 0.0
    %108 = vmatpush1.msra.mxu0 0.0
    %109 = vmatprep.subr.mxu0 0.0
    %110 = vmatpush1.msra.mxu0 0.0
    %111 = vmatprep.subr.mxu0 0.0
    %112 = vmatpush1.msra.mxu0 0.0
    %113 = vmatprep.subr.mxu0 0.0
    %114 = vmatpush1.msra.mxu0 0.0
    %115 = vmatprep.subr.mxu0 0.0
    %116 = vmatpush1.msra.mxu0 0.0
    %117 = vmatprep.subr.mxu0 0.0
    %118 = vmatpush1.msra.mxu0 0.0
    %119 = vmatprep.subr.mxu0 0.0
    %120 = vmatpush1.msra.mxu0 0.0
    %121 = vmatprep.subr.mxu0 0.0
    %122 = vmatpush1.msra.mxu0 0.0
    %123 = vmatprep.subr.mxu0 0.0
    %124 = vmatpush1.msra.mxu0 0.0
    %125 = vmatprep.subr.mxu0 0.0
    %126 = vmatpush1.msra.mxu0 0.0
    %127 = vmatprep.subr.mxu0 0.0
    %128 = vmatpush1.msra.mxu0 0.0
    %129 = vmatprep.subr.mxu0 0.0
    %130 = vmatpush1.msra.mxu0 0.0
    %131 = vmatprep.subr.mxu0 0.0
    %132 = vmatpush1.msra.mxu0 0.0
    %133 = vmatprep.mubr.f32.mxu0 0.0
    %134 = vmatmul.mubr.f32.gmra.mrb[0].mxu0 %v51
    %v135 = vpop.f32.mrb[0].mxu0
    %v136 = vadd.f32 0.0, %v135
    %v137 = vpop.f32.mrb[0].mxu0
    %138 = vmatprep.mubr.f32.mxu0 0.0
    %139 = vmatmul.mubr.f32.gmra.mrb[0].mxu0 %v52
    %v140 = vpop.f32.mrb[0].mxu0
    %v141 = vadd.f32 0.0, %v140
    %v142 = vpop.f32.mrb[0].mxu0
    %143 = vdwg.mxu0
    %v144 = vadd.f32 %v49, %v136
    %v145 = vadd.f32 %v50, %v141
    %146 = vst [vmem:[#allocation2] sm:$0xff] %v144
    %147 = vst [vmem:[#allocation2 + $0x8] sm:$0xff] %v145
    // Predicated region
    $region26: #{tpu_custom_call.1} parent=1 // pred_check
      %p148 = pneg %p43
    $region27: #{tpu_custom_call.1} parent=1 // pred_check_branch
      %150 = sbr.rel (%p148) target = $region29
    $region28: #{tpu_custom_call.1} parent=1 // pred_region
      %v151 = vld [vmem:[#allocation2] sm:$0xff]
      %v152 = vld [vmem:[#allocation2 + $0x8] sm:$0xff]
      %v153 = vld [vmem:[%s2] sm:$0x1]
      %v155 = vlaneseq
      %v156 = vshrl.u32 %v155, 7
      %v157 = vsub.s32 0, %v156
      %v158 = vrot.slane %v153, %v157
      %v160 = vadd.f32 %v151, %v158
      %v161 = vadd.f32 %v152, %v158
      %162 = vst [vmem:[#allocation8] sm:$0xff] %v160
      %163 = vst [vmem:[#allocation8 + $0x8] sm:$0xff] %v161
    $region29: #{tpu_custom_call.1} parent=1 // pred_fallthru
      _
    // Predicated region
    $region30: #{tpu_custom_call.1} parent=1 // pred_check
      _
    $region31: #{tpu_custom_call.1} parent=1 // pred_check_branch
      %165 = sbr.rel (0) target = $region33
    $region32: #{tpu_custom_call.1} parent=1 // pred_region
      %s167 = ssub.s32 256, 256
      %168 = vsyncadd [#allocation5], %s167
      %s169 = sshll.u32 [#allocation8], 4
      %s170 = int_to_ptr.vmem [resolvable:$true] %s169
      %175 = dma.vmem_to_hbm [thread:$0]  %s170, 256, %s3, [#allocation5], 128, 128, 8
    $region33: #{tpu_custom_call.1} parent=1 // pred_fallthru
      _
    // Predicated region
    $region34: #{tpu_custom_call.1} parent=1 // pred_check
      _
    $region35: #{tpu_custom_call.1} parent=1 // pred_check_branch
      %177 = sbr.rel (0) target = $region37
    $region36: #{tpu_custom_call.1} parent=1 // pred_region
      %178 = dma.done [#allocation5], 256
    $region37: #{tpu_custom_call.1} parent=1 // pred_fallthru
      _
    %179 = vsyncpa [#allocation4], 1
    %180 = vsyncpa [#allocation7], 1
    %181 = vsyncpa [#allocation5], 1

</llo_original>
